<compile_context>
chip_gen: v7x
topology: tpu7x:2x2x1
jax: 0.10.0
libtpu: 0.0.40
codegen_flags: <defaults>
</compile_context>

<pallas_src>
import math
import numpy as np
import jax
import jax.numpy as jnp
from jax.experimental import pallas as pl
from jax.experimental.pallas import tpu as pltpu


# ----------------------------------------------------------------------------
# Parameter setup (deterministic, mirrors AngSpecProp.__init__)
# ----------------------------------------------------------------------------
def make_angspec_params(whole_dim, pixel_size, focal_length, wave_lambda, n=1.0,
                        compute_dtype=jnp.bfloat16):
    wave_lambda_m = wave_lambda / n
    k = 2 * math.pi / wave_lambda_m
    f = np.fft.fftshift(np.fft.fftfreq(whole_dim, d=pixel_size))
    fxx, fyy = np.meshgrid(f, f)
    angspec = np.maximum(0.0, k ** 2 - (2 * np.pi * fxx) ** 2 - (2 * np.pi * fyy) ** 2)
    Q2 = np.exp(1j * focal_length * np.sqrt(angspec))             # (N, N) complex128

    # Pre-apply the inverse shift (the kernel multiplies the *unshifted* FFT
    # output) and fold in the 1/N^2 ifft2 normalization.
    Q2s = np.fft.ifftshift(Q2) / float(whole_dim * whole_dim)

    # Symmetric DFT matrix + host-precomputed Karatsuba planes.
    j = np.arange(whole_dim)
    G = np.exp(-2j * np.pi * np.outer(j, j) / whole_dim)
    gr, gi = G.real, G.imag
    g_planes = np.stack([gr, gi, gr + gi, gr - gi], axis=0)       # (4, N, N)
    q_planes = np.stack([Q2s.real, Q2s.imag], axis=0)             # (2, N, N)

    return (jnp.asarray(g_planes, compute_dtype),
            jnp.asarray(q_planes, compute_dtype),
            jnp.asarray(Q2, jnp.complex64))                       # reference only


# ----------------------------------------------------------------------------
# Karatsuba complex matmuls against the constant DFT matrix G = gr + i*gi
# (gsum = gr+gi) and conj(G) = gr - i*gi (gdiff = gr-gi): 3 real matmuls each,
# conj handled purely by combine signs.  Operands are cast to the constants'
# dtype (bf16 in the default mode) so the MXU runs its native bf16 path;
# accumulation is always f32 via preferred_element_type.
# ----------------------------------------------------------------------------
def _dot(a, b):
    return jnp.dot(a, b, preferred_element_type=jnp.float32)


def _mul_g_right(dr, di, gr, gi, gsum):          # (dr + i*di) @ G
    dr = dr.astype(gr.dtype); di = di.astype(gr.dtype)
    p1 = _dot(dr, gr); p2 = _dot(di, gi); p3 = _dot(dr + di, gsum)
    return p1 - p2, p3 - p1 - p2


def _mul_g_left(dr, di, gr, gi, gsum):           # G @ (dr + i*di)
    dr = dr.astype(gr.dtype); di = di.astype(gr.dtype)
    p1 = _dot(gr, dr); p2 = _dot(gi, di); p3 = _dot(gsum, dr + di)
    return p1 - p2, p3 - p1 - p2


def _mul_h_right(dr, di, gr, gi, gdiff):         # (dr + i*di) @ conj(G)
    dr = dr.astype(gr.dtype); di = di.astype(gr.dtype)
    p1 = _dot(dr, gr); p2 = _dot(di, gi); p3 = _dot(dr + di, gdiff)
    return p1 + p2, p3 - p1 + p2


def _mul_h_left(dr, di, gr, gi, gdiff):          # conj(G) @ (dr + i*di)
    dr = dr.astype(gr.dtype); di = di.astype(gr.dtype)
    p1 = _dot(gr, dr); p2 = _dot(gi, di); p3 = _dot(gdiff, dr + di)
    return p1 + p2, p3 - p1 + p2


# ----------------------------------------------------------------------------
# Pallas kernel: one lane-packed batch tile per grid step.
#   x_ref  : (2, N, L)   field planes, lane index = local_batch*N + column
#   gs_ref : (4, N, N)   [gr, gi, gr+gi, gr-gi]          (left multiplies)
#   gb_ref : (4, L, L)   block-diagonal versions of the above (right mults)
#   q_ref  : (2, N, L)   ifftshift(Q2)/N^2 tiled once per packed element
#   out_ref: (2, N, L)   propagated field planes (lane-dense stores)
# ----------------------------------------------------------------------------
def angspec_kernel(x_ref, gs_ref, gb_ref, q_ref, out_ref):
    gr, gi, gsum, gdiff = gs_ref[0], gs_ref[1], gs_ref[2], gs_ref[3]
    br, bi, bsum, bdiff = gb_ref[0], gb_ref[1], gb_ref[2], gb_ref[3]
    qr, qi = q_ref[0], q_ref[1]
    xr, xi = x_ref[0], x_ref[1]

    # Row DFT (right): T1 = X @ G   -- lane-packed via block-diag(G)
    t1r, t1i = _mul_g_right(xr, xi, br, bi, bsum)
    # Column DFT (left): A0 = G @ T1 = fft2(X)
    a0r, a0i = _mul_g_left(t1r, t1i, gr, gi, gsum)
    # Az = A0 * (ifftshift(Q2) / N^2)   (shift + scale folded on host)
    azr = qr * a0r - qi * a0i
    azi = qr * a0i + qi * a0r
    # Row IDFT (right): T2 = Az @ conj(G)
    t2r, t2i = _mul_h_right(azr, azi, br, bi, bdiff)
    # Column IDFT (left): Uz = conj(G) @ T2   (scale already applied)
    uzr, uzi = _mul_h_left(t2r, t2i, gr, gi, gdiff)

    out_ref[0] = uzr.astype(out_ref.dtype)
    out_ref[1] = uzi.astype(out_ref.dtype)


# ----------------------------------------------------------------------------
# Tiling helpers
# ----------------------------------------------------------------------------
def _pick_batch_tile(B, N):
    """Batch tile such that the packed lane width L = bt*N is a legal block
    (multiple of 128, or the full lane extent), preferring lane-dense blocks
    and a grid of >= 2 steps (v7x has 2 TensorCores sharded via 'parallel')."""
    if N % 128 == 0:
        return 1
    cands = [d for d in range(1, B + 1)
             if B % d == 0 and (d * N) % 128 == 0 and d * N <= 256]
    if not cands:
        if B * N <= 2048:
            return B                        # full-lane block: always legal, still small
        raise NotImplementedError(
            "TODO(synk): pad N to a multiple of 128 (or stream the per-element "
            "right-multiplies) for large batches with non-128-aligned N.")
    multi = [d for d in cands if B // d >= 2]
    return max(multi) if multi else max(cands)


def _vmem_limit_bytes(N, L, cdt, out_dt):
    cbytes = jnp.dtype(cdt).itemsize
    obytes = jnp.dtype(out_dt).itemsize
    const_b = (4 * N * N + 4 * L * L + 2 * N * L) * cbytes    # single-buffered consts
    io_b = 2 * (2 * N * L * cbytes) + 2 * (2 * N * L * obytes)  # double-buffered I/O blocks
    live_b = 16 * N * L * 4                                     # f32 temporaries (upper bound)
    est = const_b + io_b + live_b
    if est <= 12 * (1 << 20):
        return None                        # compiler default is plenty (small-N regime)
    try:
        cap = pltpu.get_tpu_info().vmem_capacity_bytes
    except Exception:
        cap = 64 * (1 << 20)               # conservative: v7x per-TC physical VMEM
    return int(min(0.85 * cap, 2 * est))   # leave headroom for Mosaic internal scratch


# ----------------------------------------------------------------------------
# Core API: planar packed layout in / out (no extra HBM round trips).
#   x_packed: (2, N, B*N) real/imag planes, lane index = b*N + j.
# Returns the propagated field in the same layout, dtype = g_planes.dtype.
# ----------------------------------------------------------------------------
def ang_spec_prop_packed(x_packed, g_planes, q_planes, *, batch_tile):
    cdt = g_planes.dtype
    _, N, BN = x_packed.shape
    assert BN % N == 0
    B = BN // N
    bt = batch_tile
    assert B % bt == 0, "batch must be divisible by batch_tile"
    L = bt * N
    assert (L % 128 == 0) or (L == BN), \
        "packed lane block must be 128-aligned or cover the full batch"

    x_packed = x_packed.astype(cdt)
    # Block-diagonal DFT planes for the lane-packed right multiplies.
    eye = jnp.eye(bt, dtype=cdt)
    g_block = jnp.einsum("ab,pij->paibj", eye, g_planes).reshape(4, L, L)
    # Q2 (ifftshifted, 1/N^2 folded) tiled once per packed batch element.
    q_tiled = jnp.tile(q_planes, (1, 1, bt))                    # (2, N, L)

    out_dt = cdt                                                # bf16 out in bf16 mode
    field_in = pl.BlockSpec((2, N, L), lambda b: (0, 0, b))
    field_out = pl.BlockSpec((2, N, L), lambda b: (0, 0, b))
    const_spec = pl.BlockSpec(memory_space=pltpu.MemorySpace.VMEM)

    steps = B // bt
    cbytes = jnp.dtype(cdt).itemsize
    obytes = jnp.dtype(out_dt).itemsize
    flops = steps * (12 * N * L * L + 12 * N * N * L)           # Karatsuba: 12 real matmuls
    bytes_accessed = (2 * N * BN * (cbytes + obytes)
                      + (4 * N * N + 4 * L * L + 2 * N * L) * cbytes)

    return pl.pallas_call(
        angspec_kernel,
        out_shape=jax.ShapeDtypeStruct((2, N, BN), out_dt),
        grid_spec=pltpu.PrefetchScalarGridSpec(
            num_scalar_prefetch=0,
            grid=(steps,),
            in_specs=[field_in, const_spec, const_spec, const_spec],
            out_specs=field_out,
        ),
        compiler_params=pltpu.CompilerParams(
            dimension_semantics=("parallel",),
            vmem_limit_bytes=_vmem_limit_bytes(N, L, cdt, out_dt),
        ),
        cost_estimate=pl.CostEstimate(flops=int(flops), transcendentals=0,
                                      bytes_accessed=int(bytes_accessed)),
    )(x_packed, g_planes, g_block, q_tiled)


# ----------------------------------------------------------------------------
# Convenience wrapper: complex (B, N, N) in -> complex64 (B, N, N) out.
# ----------------------------------------------------------------------------
def ang_spec_prop(x, g_planes, q_planes, *, batch_tile=None):
    B, N, _ = x.shape
    bt = batch_tile if batch_tile is not None else _pick_batch_tile(B, N)
    cdt = g_planes.dtype

    # Pack real/imag with the batch along lanes: (2, N, B*N), lane = b*N + j.
    planes = jnp.stack([jnp.real(x), jnp.imag(x)], axis=0).astype(cdt)   # (2, B, N, N)
    x_packed = planes.transpose(0, 2, 1, 3).reshape(2, N, B * N)

    out = ang_spec_prop_packed(x_packed, g_planes, q_planes, batch_tile=bt)

    out = out.astype(jnp.float32).reshape(2, N, B, N).transpose(2, 0, 1, 3)  # (B,2,N,N)
    return (out[:, 0] + 1j * out[:, 1]).astype(jnp.complex64)


# ----------------------------------------------------------------------------
# Example / self-check
# ----------------------------------------------------------------------------
if __name__ == "__main__":
    B, N = 16, 16                    # batch, spatial dim (whole_dim)
    pixel_size = 8e-6
    focal_length = 5e-3
    wave_lambda = 532e-9

    key = jax.random.PRNGKey(0)
    k1, k2 = jax.random.split(key)
    x = (jax.random.normal(k1, (B, N, N), jnp.float32)
         + 1j * jax.random.normal(k2, (B, N, N), jnp.float32))   # complex64

    # Pure-JAX reference following the torch semantics exactly.
    g_bf16, q_bf16, Q2_unshifted = make_angspec_params(
        N, pixel_size, focal_length, wave_lambda)                # bf16 default
    A0 = jnp.fft.fftshift(jnp.fft.fft2(x), axes=(-2, -1))
    Az = A0 * Q2_unshifted
    ref = jnp.fft.ifft2(jnp.fft.ifftshift(Az, axes=(-2, -1)))
    ref = np.asarray(jax.block_until_ready(ref))

    # Default path: bf16 MXU compute, f32 accumulation, lane-packed batch tile.
    uz = jax.block_until_ready(ang_spec_prop(x, g_bf16, q_bf16))
    np.testing.assert_allclose(np.asarray(uz), ref, atol=0.35, rtol=0.05)

    # Opt-in f32 accuracy mode (strict check).
    g_f32, q_f32, _ = make_angspec_params(
        N, pixel_size, focal_length, wave_lambda, compute_dtype=jnp.float32)
    uz32 = jax.block_until_ready(ang_spec_prop(x, g_f32, q_f32))
    np.testing.assert_allclose(np.asarray(uz32), ref, atol=2e-3, rtol=2e-3)

    print("KERNEL_OK")
</pallas_src>

<mosaic_0001>
module attributes {stable_mosaic.version = 11 : i64} {
  func.func @angspec_kernel(%arg0: i32, %arg1: memref<2x16x128xbf16, #tpu.memory_space<vmem>>, %arg2: memref<4x16x16xbf16, #tpu.memory_space<vmem>>, %arg3: memref<4x128x128xbf16, #tpu.memory_space<vmem>>, %arg4: memref<2x16x128xbf16, #tpu.memory_space<vmem>>, %arg5: memref<2x16x128xbf16, #tpu.memory_space<vmem>>) attributes {dimension_semantics = [#tpu.dimension_semantics<parallel>], iteration_bounds = array<i64: 2>, scalar_prefetch = 0 : i64, scratch_operands = 0 : i64, tpu.core_type = #tpu.core_type<tc>, window_params = [{transform_indices = @transform_0, window_bounds = array<i64: 2, 16, 128>}, {pipeline_mode = #tpu.pipeline_mode<synchronous>, transform_indices = @transform_1, window_bounds = array<i64: 4, 16, 16>}, {pipeline_mode = #tpu.pipeline_mode<synchronous>, transform_indices = @transform_2, window_bounds = array<i64: 4, 128, 128>}, {pipeline_mode = #tpu.pipeline_mode<synchronous>, transform_indices = @transform_3, window_bounds = array<i64: 2, 16, 128>}, {transform_indices = @transform_4, window_bounds = array<i64: 2, 16, 128>}]} {
    %c0 = arith.constant 0 : index
    %c0_0 = arith.constant 0 : index
    %c0_1 = arith.constant 0 : index
    %0 = vector.load %arg2[%c0, %c0_0, %c0_1] : memref<4x16x16xbf16, #tpu.memory_space<vmem>>, vector<1x16x16xbf16>
    %1 = vector.shape_cast %0 : vector<1x16x16xbf16> to vector<16x16xbf16>
    %c1 = arith.constant 1 : index
    %c0_2 = arith.constant 0 : index
    %c0_3 = arith.constant 0 : index
    %2 = vector.load %arg2[%c1, %c0_2, %c0_3] : memref<4x16x16xbf16, #tpu.memory_space<vmem>>, vector<1x16x16xbf16>
    %3 = vector.shape_cast %2 : vector<1x16x16xbf16> to vector<16x16xbf16>
    %c2 = arith.constant 2 : index
    %c0_4 = arith.constant 0 : index
    %c0_5 = arith.constant 0 : index
    %4 = vector.load %arg2[%c2, %c0_4, %c0_5] : memref<4x16x16xbf16, #tpu.memory_space<vmem>>, vector<1x16x16xbf16>
    %5 = vector.shape_cast %4 : vector<1x16x16xbf16> to vector<16x16xbf16>
    %c3 = arith.constant 3 : index
    %c0_6 = arith.constant 0 : index
    %c0_7 = arith.constant 0 : index
    %6 = vector.load %arg2[%c3, %c0_6, %c0_7] : memref<4x16x16xbf16, #tpu.memory_space<vmem>>, vector<1x16x16xbf16>
    %7 = vector.shape_cast %6 : vector<1x16x16xbf16> to vector<16x16xbf16>
    %c0_8 = arith.constant 0 : index
    %c0_9 = arith.constant 0 : index
    %c0_10 = arith.constant 0 : index
    %8 = vector.load %arg3[%c0_8, %c0_9, %c0_10] : memref<4x128x128xbf16, #tpu.memory_space<vmem>>, vector<1x128x128xbf16>
    %9 = vector.shape_cast %8 : vector<1x128x128xbf16> to vector<128x128xbf16>
    %c1_11 = arith.constant 1 : index
    %c0_12 = arith.constant 0 : index
    %c0_13 = arith.constant 0 : index
    %10 = vector.load %arg3[%c1_11, %c0_12, %c0_13] : memref<4x128x128xbf16, #tpu.memory_space<vmem>>, vector<1x128x128xbf16>
    %11 = vector.shape_cast %10 : vector<1x128x128xbf16> to vector<128x128xbf16>
    %c2_14 = arith.constant 2 : index
    %c0_15 = arith.constant 0 : index
    %c0_16 = arith.constant 0 : index
    %12 = vector.load %arg3[%c2_14, %c0_15, %c0_16] : memref<4x128x128xbf16, #tpu.memory_space<vmem>>, vector<1x128x128xbf16>
    %13 = vector.shape_cast %12 : vector<1x128x128xbf16> to vector<128x128xbf16>
    %c3_17 = arith.constant 3 : index
    %c0_18 = arith.constant 0 : index
    %c0_19 = arith.constant 0 : index
    %14 = vector.load %arg3[%c3_17, %c0_18, %c0_19] : memref<4x128x128xbf16, #tpu.memory_space<vmem>>, vector<1x128x128xbf16>
    %15 = vector.shape_cast %14 : vector<1x128x128xbf16> to vector<128x128xbf16>
    %c0_20 = arith.constant 0 : index
    %c0_21 = arith.constant 0 : index
    %c0_22 = arith.constant 0 : index
    %16 = vector.load %arg4[%c0_20, %c0_21, %c0_22] : memref<2x16x128xbf16, #tpu.memory_space<vmem>>, vector<1x16x128xbf16>
    %17 = vector.shape_cast %16 : vector<1x16x128xbf16> to vector<16x128xbf16>
    %c1_23 = arith.constant 1 : index
    %c0_24 = arith.constant 0 : index
    %c0_25 = arith.constant 0 : index
    %18 = vector.load %arg4[%c1_23, %c0_24, %c0_25] : memref<2x16x128xbf16, #tpu.memory_space<vmem>>, vector<1x16x128xbf16>
    %19 = vector.shape_cast %18 : vector<1x16x128xbf16> to vector<16x128xbf16>
    %c0_26 = arith.constant 0 : index
    %c0_27 = arith.constant 0 : index
    %c0_28 = arith.constant 0 : index
    %20 = vector.load %arg1[%c0_26, %c0_27, %c0_28] : memref<2x16x128xbf16, #tpu.memory_space<vmem>>, vector<1x16x128xbf16>
    %21 = vector.shape_cast %20 : vector<1x16x128xbf16> to vector<16x128xbf16>
    %c1_29 = arith.constant 1 : index
    %c0_30 = arith.constant 0 : index
    %c0_31 = arith.constant 0 : index
    %22 = vector.load %arg1[%c1_29, %c0_30, %c0_31] : memref<2x16x128xbf16, #tpu.memory_space<vmem>>, vector<1x16x128xbf16>
    %23 = vector.shape_cast %22 : vector<1x16x128xbf16> to vector<16x128xbf16>
    %cst = arith.constant dense<0.000000e+00> : vector<16x128xf32>
    %24 = tpu.matmul %21, %9, %cst {dimension_numbers = #tpu.dot_dimension_numbers<[1], [0], [0], [1], [0, 0, 1, 1], [], []>} : vector<16x128xbf16>, vector<128x128xbf16>, vector<16x128xf32> -> vector<16x128xf32>
    %cst_32 = arith.constant dense<0.000000e+00> : vector<16x128xf32>
    %25 = tpu.matmul %23, %11, %cst_32 {dimension_numbers = #tpu.dot_dimension_numbers<[1], [0], [0], [1], [0, 0, 1, 1], [], []>} : vector<16x128xbf16>, vector<128x128xbf16>, vector<16x128xf32> -> vector<16x128xf32>
    %26 = arith.addf %21, %23 : vector<16x128xbf16>
    %cst_33 = arith.constant dense<0.000000e+00> : vector<16x128xf32>
    %27 = tpu.matmul %26, %13, %cst_33 {dimension_numbers = #tpu.dot_dimension_numbers<[1], [0], [0], [1], [0, 0, 1, 1], [], []>} : vector<16x128xbf16>, vector<128x128xbf16>, vector<16x128xf32> -> vector<16x128xf32>
    %28 = arith.subf %24, %25 : vector<16x128xf32>
    %29 = arith.subf %27, %24 : vector<16x128xf32>
    %30 = arith.subf %29, %25 : vector<16x128xf32>
    %31 = arith.truncf %28 : vector<16x128xf32> to vector<16x128xbf16>
    %32 = arith.truncf %30 : vector<16x128xf32> to vector<16x128xbf16>
    %cst_34 = arith.constant dense<0.000000e+00> : vector<16x128xf32>
    %33 = tpu.matmul %1, %31, %cst_34 {dimension_numbers = #tpu.dot_dimension_numbers<[1], [0], [0], [1], [0, 0, 1, 1], [], []>} : vector<16x16xbf16>, vector<16x128xbf16>, vector<16x128xf32> -> vector<16x128xf32>
    %cst_35 = arith.constant dense<0.000000e+00> : vector<16x128xf32>
    %34 = tpu.matmul %3, %32, %cst_35 {dimension_numbers = #tpu.dot_dimension_numbers<[1], [0], [0], [1], [0, 0, 1, 1], [], []>} : vector<16x16xbf16>, vector<16x128xbf16>, vector<16x128xf32> -> vector<16x128xf32>
    %35 = arith.addf %31, %32 : vector<16x128xbf16>
    %cst_36 = arith.constant dense<0.000000e+00> : vector<16x128xf32>
    %36 = tpu.matmul %5, %35, %cst_36 {dimension_numbers = #tpu.dot_dimension_numbers<[1], [0], [0], [1], [0, 0, 1, 1], [], []>} : vector<16x16xbf16>, vector<16x128xbf16>, vector<16x128xf32> -> vector<16x128xf32>
    %37 = arith.subf %33, %34 : vector<16x128xf32>
    %38 = arith.subf %36, %33 : vector<16x128xf32>
    %39 = arith.subf %38, %34 : vector<16x128xf32>
    %40 = arith.extf %17 : vector<16x128xbf16> to vector<16x128xf32>
    %41 = arith.mulf %40, %37 : vector<16x128xf32>
    %42 = arith.extf %19 : vector<16x128xbf16> to vector<16x128xf32>
    %43 = arith.mulf %42, %39 : vector<16x128xf32>
    %44 = arith.subf %41, %43 : vector<16x128xf32>
    %45 = arith.extf %17 : vector<16x128xbf16> to vector<16x128xf32>
    %46 = arith.mulf %45, %39 : vector<16x128xf32>
    %47 = arith.extf %19 : vector<16x128xbf16> to vector<16x128xf32>
    %48 = arith.mulf %47, %37 : vector<16x128xf32>
    %49 = arith.addf %46, %48 : vector<16x128xf32>
    %50 = arith.truncf %44 : vector<16x128xf32> to vector<16x128xbf16>
    %51 = arith.truncf %49 : vector<16x128xf32> to vector<16x128xbf16>
    %cst_37 = arith.constant dense<0.000000e+00> : vector<16x128xf32>
    %52 = tpu.matmul %50, %9, %cst_37 {dimension_numbers = #tpu.dot_dimension_numbers<[1], [0], [0], [1], [0, 0, 1, 1], [], []>} : vector<16x128xbf16>, vector<128x128xbf16>, vector<16x128xf32> -> vector<16x128xf32>
    %cst_38 = arith.constant dense<0.000000e+00> : vector<16x128xf32>
    %53 = tpu.matmul %51, %11, %cst_38 {dimension_numbers = #tpu.dot_dimension_numbers<[1], [0], [0], [1], [0, 0, 1, 1], [], []>} : vector<16x128xbf16>, vector<128x128xbf16>, vector<16x128xf32> -> vector<16x128xf32>
    %54 = arith.addf %50, %51 : vector<16x128xbf16>
    %cst_39 = arith.constant dense<0.000000e+00> : vector<16x128xf32>
    %55 = tpu.matmul %54, %15, %cst_39 {dimension_numbers = #tpu.dot_dimension_numbers<[1], [0], [0], [1], [0, 0, 1, 1], [], []>} : vector<16x128xbf16>, vector<128x128xbf16>, vector<16x128xf32> -> vector<16x128xf32>
    %56 = arith.addf %52, %53 : vector<16x128xf32>
    %57 = arith.subf %55, %52 : vector<16x128xf32>
    %58 = arith.addf %57, %53 : vector<16x128xf32>
    %59 = arith.truncf %56 : vector<16x128xf32> to vector<16x128xbf16>
    %60 = arith.truncf %58 : vector<16x128xf32> to vector<16x128xbf16>
    %cst_40 = arith.constant dense<0.000000e+00> : vector<16x128xf32>
    %61 = tpu.matmul %1, %59, %cst_40 {dimension_numbers = #tpu.dot_dimension_numbers<[1], [0], [0], [1], [0, 0, 1, 1], [], []>} : vector<16x16xbf16>, vector<16x128xbf16>, vector<16x128xf32> -> vector<16x128xf32>
    %cst_41 = arith.constant dense<0.000000e+00> : vector<16x128xf32>
    %62 = tpu.matmul %3, %60, %cst_41 {dimension_numbers = #tpu.dot_dimension_numbers<[1], [0], [0], [1], [0, 0, 1, 1], [], []>} : vector<16x16xbf16>, vector<16x128xbf16>, vector<16x128xf32> -> vector<16x128xf32>
    %63 = arith.addf %59, %60 : vector<16x128xbf16>
    %cst_42 = arith.constant dense<0.000000e+00> : vector<16x128xf32>
    %64 = tpu.matmul %7, %63, %cst_42 {dimension_numbers = #tpu.dot_dimension_numbers<[1], [0], [0], [1], [0, 0, 1, 1], [], []>} : vector<16x16xbf16>, vector<16x128xbf16>, vector<16x128xf32> -> vector<16x128xf32>
    %65 = arith.addf %61, %62 : vector<16x128xf32>
    %66 = arith.subf %64, %61 : vector<16x128xf32>
    %67 = arith.addf %66, %62 : vector<16x128xf32>
    %68 = arith.truncf %65 : vector<16x128xf32> to vector<16x128xbf16>
    %c0_43 = arith.constant 0 : index
    %c0_44 = arith.constant 0 : index
    %c0_45 = arith.constant 0 : index
    %69 = vector.load %arg5[%c0_43, %c0_44, %c0_45] : memref<2x16x128xbf16, #tpu.memory_space<vmem>>, vector<1x16x128xbf16>
    %70 = vector.shape_cast %69 : vector<1x16x128xbf16> to vector<16x128xbf16>
    %71 = vector.shape_cast %68 : vector<16x128xbf16> to vector<1x16x128xbf16>
    tpu.vector_store %arg5[%c0_43, %c0_44, %c0_45], %71 {strides = array<i32>} : memref<2x16x128xbf16, #tpu.memory_space<vmem>>, vector<1x16x128xbf16>,
    %72 = arith.truncf %67 : vector<16x128xf32> to vector<16x128xbf16>
    %c1_46 = arith.constant 1 : index
    %c0_47 = arith.constant 0 : index
    %c0_48 = arith.constant 0 : index
    %73 = vector.load %arg5[%c1_46, %c0_47, %c0_48] : memref<2x16x128xbf16, #tpu.memory_space<vmem>>, vector<1x16x128xbf16>
    %74 = vector.shape_cast %73 : vector<1x16x128xbf16> to vector<16x128xbf16>
    %75 = vector.shape_cast %72 : vector<16x128xbf16> to vector<1x16x128xbf16>
    tpu.vector_store %arg5[%c1_46, %c0_47, %c0_48], %75 {strides = array<i32>} : memref<2x16x128xbf16, #tpu.memory_space<vmem>>, vector<1x16x128xbf16>,
    return
  }
  func.func @transform_0(%arg0: i32) -> (i32, i32, i32) {
    %c0_i32 = arith.constant 0 : i32
    %c0_i32_0 = arith.constant 0 : i32
    %c0_i32_1 = arith.constant 0 : i32
    return %c0_i32, %c0_i32_0, %arg0 : i32, i32, i32
  }
  func.func @transform_1(%arg0: i32) -> (i32, i32, i32) {
    %c0_i32 = arith.constant 0 : i32
    %c0_i32_0 = arith.constant 0 : i32
    %c0_i32_1 = arith.constant 0 : i32
    %c0_i32_2 = arith.constant 0 : i32
    return %c0_i32, %c0_i32_0, %c0_i32_1 : i32, i32, i32
  }
  func.func @transform_2(%arg0: i32) -> (i32, i32, i32) {
    %c0_i32 = arith.constant 0 : i32
    %c0_i32_0 = arith.constant 0 : i32
    %c0_i32_1 = arith.constant 0 : i32
    %c0_i32_2 = arith.constant 0 : i32
    return %c0_i32, %c0_i32_0, %c0_i32_1 : i32, i32, i32
  }
  func.func @transform_3(%arg0: i32) -> (i32, i32, i32) {
    %c0_i32 = arith.constant 0 : i32
    %c0_i32_0 = arith.constant 0 : i32
    %c0_i32_1 = arith.constant 0 : i32
    %c0_i32_2 = arith.constant 0 : i32
    return %c0_i32, %c0_i32_0, %c0_i32_1 : i32, i32, i32
  }
  func.func @transform_4(%arg0: i32) -> (i32, i32, i32) {
    %c0_i32 = arith.constant 0 : i32
    %c0_i32_0 = arith.constant 0 : i32
    %c0_i32_1 = arith.constant 0 : i32
    return %c0_i32, %c0_i32_0, %arg0 : i32, i32, i32
  }
}

</mosaic_0001>

<llo_original>
// kernel: tpu_custom_call.1
$region0: #{tpu_custom_call.1}
  #allocation0 [shape = 'u32[]', space=smem, size = 0x4, offset = 0x4, fixed_abs, tag = 'smem constant byte address 0x4 - core index']
  #allocation1 [shape = 'u32[144,128]{1,0:T(1,128)}', space=vmem, size = 0x12000, scoped, tag = 'internal scratch']
  %s0 = inlined_call_operand.hbm [shape: bf16[2,16,256], index: 0, kind: input, shape index: {}]
  %s1 = inlined_call_operand.hbm [shape: bf16[4,16,16], index: 1, kind: input, shape index: {}]
  %s2 = inlined_call_operand.hbm [shape: bf16[4,128,128], index: 2, kind: input, shape index: {}]
  %s3 = inlined_call_operand.hbm [shape: bf16[2,16,128], index: 3, kind: input, shape index: {}]
  %s4 = inlined_call_operand.hbm [shape: bf16[2,16,256], index: 4, kind: output, shape index: {}]
  %s5 = sld [smem:[#allocation0]]
  $region65: #{tpu_custom_call.1} parent=0
    _
  %s7 = ssub.s32 1, %s5
  %s8 = scalar_select 0, %s7, %s5
  $region1: #{tpu_custom_call.1} parent=0
    #allocation2 [shape = 'u8[16384]{0}', space=vmem, size = 0x4000, scoped, tag = 'input window, operand 0']
    #allocation3 [shape = 's32[2]{0}', space=sflag, size = 0x8, scoped, tag = 'scoped memory for tpu_custom_call.1']
    #allocation4 [shape = 's32[2]{0}', space=sflag, size = 0x8, scoped, tag = 'scoped memory for tpu_custom_call.1']
    #allocation5 [shape = 'u8[16384]{0}', space=vmem, size = 0x4000, scoped, tag = 'input window, operand 1, single buffered']
    #allocation6 [shape = 's32[1]{0}', space=sflag, size = 0x4, scoped, tag = 'scoped memory for tpu_custom_call.1']
    #allocation7 [shape = 'u8[131072]{0}', space=vmem, size = 0x20000, scoped, tag = 'input window, operand 2, single buffered']
    #allocation8 [shape = 'u8[8192]{0}', space=vmem, size = 0x2000, scoped, tag = 'input window, operand 3, single buffered']
    #allocation9 [shape = 's32[1]{0}', space=sflag, size = 0x4, scoped, tag = 'scoped memory for tpu_custom_call.1']
    #allocation10 [shape = 'u8[16384]{0}', space=vmem, size = 0x4000, scoped, tag = 'output window, operand 0']
    %9 = vsyncpa [#allocation3], 0
    %s10 = scalar_lea.sflag [#allocation3], 1
    %11 = vsyncpa %s10, 0
    %12 = vsyncpa [#allocation6], 0
    %13 = vsyncpa [#allocation9], 0
    %14 = vsyncpa [#allocation4], 0
    %s15 = scalar_lea.sflag [#allocation4], 1
    %16 = vsyncpa %s15, 0
    loop: start=0, step=1, limit=4
    $region2: #{tpu_custom_call.1} parent=1 // loop_pre_header
      _
    $region3: #{tpu_custom_call.1} parent=1 // loop_header
      %s18 = sphi 0, %s22
      %p19 = scmp.ge.s32.totalorder %s18, 4
      %s28 = sphi 0, %s30
      %s31 = sphi 0, %s28
      %s32 = sphi 0, %s31
      %s48 = sphi 0, %s32
      %s52 = sphi 0, %s52
      %s54 = sphi 0, %s52
      %s55 = sphi 0, %s54
      %s69 = sphi 0, %s55
      %s73 = sphi 0, %s73
      %s75 = sphi 0, %s73
      %s76 = sphi 0, %s75
      %s90 = sphi 0, %s76
      %s94 = sphi 0, %s94
      %s96 = sphi 0, %s94
      %s97 = sphi 0, %s96
      %s111 = sphi 0, %s97
      %s117 = sphi 0, %s119
      %s120 = sphi 0, %s117
      %s121 = sphi 0, %s120
      %s137 = sphi 0, %s121
    $region4: #{tpu_custom_call.1} parent=1 // loop_header_branch
      %21 = sbr.rel (%p19) target = $region8
    $region5: #{tpu_custom_call.1} parent=1 // loop_body
      %s23 = ssub.s32 %s18, 1
      %s24 = ssub.s32 %s18, 2
      %s25 = sadd.s32 %s18, 1
      %s26 = ssub.s32 %s18, %s25
      %p27 = scmp.eq.s32.totalorder %s26, 0
      %s29 = sadd.s32 %s28, 1
      %s30 = scalar_select %p27, %s28, %s29
      %p33 = pneg %p27
      %p34 = scmp.eq.s32.totalorder %s18, 1
      %p35 = por %p33, %p34
      %p36 = scmp.ne.s32.totalorder %s28, %s31
      %p37 = scmp.eq.s32.totalorder %s18, 0
      %p38 = por %p36, %p37
      %p39 = scmp.ne.s32.totalorder %s28, %s31
      %p40 = scmp.eq.s32.totalorder %s23, 1
      %p41 = por %p39, %p40
      %p42 = scmp.ne.s32.totalorder %s31, %s32
      %p43 = scmp.eq.s32.totalorder %s23, 0
      %p44 = por %p42, %p43
      %p45 = scmp.ne.s32.totalorder %s31, %s32
      %p46 = scmp.eq.s32.totalorder %s24, 1
      %p47 = por %p45, %p46
      %p49 = scmp.ne.s32.totalorder %s32, %s48
      %p50 = scmp.eq.s32.totalorder %s24, 0
      %p51 = por %p49, %p50
      %s53 = sadd.s32 %s52, 1
      %p56 = scmp.eq.s32.totalorder %s18, 1
      %p57 = scmp.ne.s32.totalorder %s52, %s54
      %p58 = scmp.eq.s32.totalorder %s18, 0
      %p59 = por %p57, %p58
      %p60 = scmp.ne.s32.totalorder %s52, %s54
      %p61 = scmp.eq.s32.totalorder %s23, 1
      %p62 = por %p60, %p61
      %p63 = scmp.ne.s32.totalorder %s54, %s55
      %p64 = scmp.eq.s32.totalorder %s23, 0
      %p65 = por %p63, %p64
      %p66 = scmp.ne.s32.totalorder %s54, %s55
      %p67 = scmp.eq.s32.totalorder %s24, 1
      %p68 = por %p66, %p67
      %p70 = scmp.ne.s32.totalorder %s55, %s69
      %p71 = scmp.eq.s32.totalorder %s24, 0
      %p72 = por %p70, %p71
      %s74 = sadd.s32 %s73, 1
      %p77 = scmp.eq.s32.totalorder %s18, 1
      %p78 = scmp.ne.s32.totalorder %s73, %s75
      %p79 = scmp.eq.s32.totalorder %s18, 0
      %p80 = por %p78, %p79
      %p81 = scmp.ne.s32.totalorder %s73, %s75
      %p82 = scmp.eq.s32.totalorder %s23, 1
      %p83 = por %p81, %p82
      %p84 = scmp.ne.s32.totalorder %s75, %s76
      %p85 = scmp.eq.s32.totalorder %s23, 0
      %p86 = por %p84, %p85
      %p87 = scmp.ne.s32.totalorder %s75, %s76
      %p88 = scmp.eq.s32.totalorder %s24, 1
      %p89 = por %p87, %p88
      %p91 = scmp.ne.s32.totalorder %s76, %s90
      %p92 = scmp.eq.s32.totalorder %s24, 0
      %p93 = por %p91, %p92
      %s95 = sadd.s32 %s94, 1
      %p98 = scmp.eq.s32.totalorder %s18, 1
      %p99 = scmp.ne.s32.totalorder %s94, %s96
      %p100 = scmp.eq.s32.totalorder %s18, 0
      %p101 = por %p99, %p100
      %p102 = scmp.ne.s32.totalorder %s94, %s96
      %p103 = scmp.eq.s32.totalorder %s23, 1
      %p104 = por %p102, %p103
      %p105 = scmp.ne.s32.totalorder %s96, %s97
      %p106 = scmp.eq.s32.totalorder %s23, 0
      %p107 = por %p105, %p106
      %p108 = scmp.ne.s32.totalorder %s96, %s97
      %p109 = scmp.eq.s32.totalorder %s24, 1
      %p110 = por %p108, %p109
      %p112 = scmp.ne.s32.totalorder %s97, %s111
      %p113 = scmp.eq.s32.totalorder %s24, 0
      %p114 = por %p112, %p113
      %s115 = ssub.s32 %s18, %s25
      %p116 = scmp.eq.s32.totalorder %s115, 0
      %s118 = sadd.s32 %s117, 1
      %s119 = scalar_select %p116, %s117, %s118
      %p122 = pneg %p116
      %p123 = scmp.eq.s32.totalorder %s18, 1
      %p124 = por %p122, %p123
      %p125 = scmp.ne.s32.totalorder %s117, %s120
      %p126 = scmp.eq.s32.totalorder %s18, 0
      %p127 = por %p125, %p126
      %p128 = scmp.ne.s32.totalorder %s117, %s120
      %p129 = scmp.eq.s32.totalorder %s23, 1
      %p130 = por %p128, %p129
      %p131 = scmp.ne.s32.totalorder %s120, %s121
      %p132 = scmp.eq.s32.totalorder %s23, 0
      %p133 = por %p131, %p132
      %p134 = scmp.ne.s32.totalorder %s120, %s121
      %p135 = scmp.eq.s32.totalorder %s24, 1
      %p136 = por %p134, %p135
      %p138 = scmp.ne.s32.totalorder %s121, %s137
      %p139 = scmp.eq.s32.totalorder %s24, 0
      %p140 = por %p138, %p139
      %p141 = scmp.le.s32.totalorder 1, %s18
      %p142 = scmp.lt.s32.totalorder %s18, 3
      %p143 = pnand %p141, %p142
      %p144 = pneg %p143
      // Predicated region
      $region9: #{tpu_custom_call.1} parent=5 // pred_check
        _
      $region10: #{tpu_custom_call.1} parent=5 // pred_check_branch
        %146 = sbr.rel (%p143) target = $region12
      $region11: #{tpu_custom_call.1} parent=5 // pred_region
        %s147 = ssub.s32 %s18, 1
        // Predicated region
        $region13: #{tpu_custom_call.1} parent=11 // pred_check
          %p148 = pneg %p65
        $region14: #{tpu_custom_call.1} parent=11 // pred_check_branch
          %150 = sbr.rel (%p148) target = $region16
        $region15: #{tpu_custom_call.1} parent=11 // pred_region
          %s152 = ssub.s32 512, 512
          %153 = vsyncadd [#allocation6], %s152
          %s154 = sshll.u32 [#allocation5], 4
          %s155 = int_to_ptr.vmem [resolvable:$true] %s154
          %160 = dma.hbm_to_vmem [thread:$0]  %s1, 512, %s155, [#allocation6], 64, 64, 4
        $region16: #{tpu_custom_call.1} parent=11 // pred_fallthru
          _
        // Predicated region
        $region17: #{tpu_custom_call.1} parent=11 // pred_check
          %p161 = pneg %p86
        $region18: #{tpu_custom_call.1} parent=11 // pred_check_branch
          %163 = sbr.rel (%p161) target = $region20
        $region19: #{tpu_custom_call.1} parent=11 // pred_region
          %s165 = ssub.s32 4096, 4096
          %166 = vsyncadd [#allocation6], %s165
          %s167 = sshll.u32 [#allocation7], 4
          %s168 = int_to_ptr.vmem [resolvable:$true] %s167
          %173 = dma.hbm_to_vmem [thread:$0]  %s2, 4096, %s168, [#allocation6], 64, 64, 4
        $region20: #{tpu_custom_call.1} parent=11 // pred_fallthru
          _
        // Predicated region
        $region21: #{tpu_custom_call.1} parent=11 // pred_check
          %p174 = pneg %p107
        $region22: #{tpu_custom_call.1} parent=11 // pred_check_branch
          %176 = sbr.rel (%p174) target = $region24
        $region23: #{tpu_custom_call.1} parent=11 // pred_region
          %s178 = ssub.s32 256, 256
          %179 = vsyncadd [#allocation9], %s178
          %s180 = sshll.u32 [#allocation8], 4
          %s181 = int_to_ptr.vmem [resolvable:$true] %s180
          %186 = dma.hbm_to_vmem [thread:$0]  %s3, 256, %s181, [#allocation9], 64, 64, 4
        $region24: #{tpu_custom_call.1} parent=11 // pred_fallthru
          _
      $region12: #{tpu_custom_call.1} parent=5 // pred_fallthru
        _
      %p187 = scmp.lt.s32.totalorder %s18, 2
      // Predicated region
      $region25: #{tpu_custom_call.1} parent=5 // pred_check
        %p188 = pneg %p187
      $region26: #{tpu_custom_call.1} parent=5 // pred_check_branch
        %190 = sbr.rel (%p188) target = $region28
      $region27: #{tpu_custom_call.1} parent=5 // pred_region
        // Predicated region
        $region29: #{tpu_custom_call.1} parent=27 // pred_check
          %p191 = pneg %p38
        $region30: #{tpu_custom_call.1} parent=27 // pred_check_branch
          %193 = sbr.rel (%p191) target = $region32
        $region31: #{tpu_custom_call.1} parent=27 // pred_region
          %s194 = sand.u32 %s28, 1
          %s195 = scalar_lea.sflag [#allocation3], %s194
          %s196 = sand.u32 %s28, 1
          %s197 = smul.addr %s196, 16
          %s198 = scalar_lea.vmem [#allocation2], %s197
          %s200 = ssub.s32 256, 256
          %201 = vsyncadd %s195, %s200
          %s202 = smul.addr %s18, 64
          %s203 = scalar_lea.hbm %s0, %s202
          %s204 = sshll.u32 %s198, 4
          %s205 = int_to_ptr.vmem [resolvable:$true] %s204
          %210 = dma.hbm_to_vmem [thread:$0]  %s203, 256, %s205, %s195, 128, 64, 4
        $region32: #{tpu_custom_call.1} parent=27 // pred_fallthru
          _
      $region28: #{tpu_custom_call.1} parent=5 // pred_fallthru
        _
      %p211 = scmp.le.s32.totalorder 1, %s18
      %p212 = scmp.lt.s32.totalorder %s18, 3
      %p213 = pnand %p211, %p212
      %p214 = pneg %p213
      // Predicated region
      $region33: #{tpu_custom_call.1} parent=5 // pred_check
        _
      $region34: #{tpu_custom_call.1} parent=5 // pred_check_branch
        %216 = sbr.rel (%p213) target = $region36
      $region35: #{tpu_custom_call.1} parent=5 // pred_region
        %s217 = ssub.s32 %s18, 1
        %s218 = sand.u32 %s31, 1
        %s219 = scalar_lea.sflag [#allocation3], %s218
        %s220 = sand.u32 %s31, 1
        %s221 = smul.addr %s220, 16
        %s222 = scalar_lea.vmem [#allocation2], %s221
        // Predicated region
        $region37: #{tpu_custom_call.1} parent=35 // pred_check
          %p223 = pneg %p44
        $region38: #{tpu_custom_call.1} parent=35 // pred_check_branch
          %225 = sbr.rel (%p223) target = $region40
        $region39: #{tpu_custom_call.1} parent=35 // pred_region
          %226 = dma.done %s219, 256
        $region40: #{tpu_custom_call.1} parent=35 // pred_fallthru
          _
        // Predicated region
        $region41: #{tpu_custom_call.1} parent=35 // pred_check
          %p227 = pneg %p65
        $region42: #{tpu_custom_call.1} parent=35 // pred_check_branch
          %229 = sbr.rel (%p227) target = $region44
        $region43: #{tpu_custom_call.1} parent=35 // pred_region
          %230 = dma.done [#allocation6], 512
        $region44: #{tpu_custom_call.1} parent=35 // pred_fallthru
          _
        // Predicated region
        $region45: #{tpu_custom_call.1} parent=35 // pred_check
          %p231 = pneg %p86
        $region46: #{tpu_custom_call.1} parent=35 // pred_check_branch
          %233 = sbr.rel (%p231) target = $region48
        $region47: #{tpu_custom_call.1} parent=35 // pred_region
          %234 = dma.done [#allocation6], 4096
        $region48: #{tpu_custom_call.1} parent=35 // pred_fallthru
          _
        // Predicated region
        $region49: #{tpu_custom_call.1} parent=35 // pred_check
          %p235 = pneg %p107
        $region50: #{tpu_custom_call.1} parent=35 // pred_check_branch
          %237 = sbr.rel (%p235) target = $region52
        $region51: #{tpu_custom_call.1} parent=35 // pred_region
          %238 = dma.done [#allocation9], 256
        $region52: #{tpu_custom_call.1} parent=35 // pred_fallthru
          _
        %s239 = sand.u32 %s31, 1
        %s240 = scalar_lea.sflag [#allocation3], %s239
        %s241 = sand.u32 %s31, 1
        %s242 = smul.addr %s241, 16
        %s243 = scalar_lea.vmem [#allocation2], %s242
        %p244 = pneg %p44
        %p245 = pneg %p41
        %p246 = pneg %p65
        %p247 = pneg %p62
        %p248 = pneg %p86
        %p249 = pneg %p83
        %p250 = pneg %p107
        %p251 = pneg %p104
        %p252 = pneg %p133
        %p253 = pneg %p130
        %s254 = sand.u32 %s120, 1
        %s255 = scalar_lea.sflag [#allocation4], %s254
        %s256 = sand.u32 %s120, 1
        %s257 = smul.addr %s256, 16
        %s258 = scalar_lea.vmem [#allocation10], %s257
        %v260 = vld [vmem:[#allocation5] sm:$0xf]
        %v261 = vld [vmem:[#allocation5 + $0x4] sm:$0xf]
        %s262 = scalar_lea.vmem [#allocation5], 8
        %v263 = vld [vmem:[%s262] sm:$0xf]
        %v264 = vld [vmem:[%s262 + $0x4] sm:$0xf]
        %s265 = scalar_lea.vmem [#allocation5], 16
        %v266 = vld [vmem:[%s265] sm:$0xf]
        %v267 = vld [vmem:[%s265 + $0x4] sm:$0xf]
        %s268 = scalar_lea.vmem [#allocation5], 24
        %v269 = vld [vmem:[%s268] sm:$0xf]
        %v270 = vld [vmem:[%s268 + $0x4] sm:$0xf]
        %v271 = vld [vmem:[#allocation7] sm:$0xf]
        %v272 = vld [vmem:[#allocation7 + $0x4] sm:$0xf]
        %v273 = vld [vmem:[#allocation7 + $0x8] sm:$0xf]
        %v274 = vld [vmem:[#allocation7 + $0xc] sm:$0xf]
        %v275 = vld [vmem:[#allocation7 + $0x10] sm:$0xf]
        %v276 = vld [vmem:[#allocation7 + $0x14] sm:$0xf]
        %v277 = vld [vmem:[#allocation7 + $0x18] sm:$0xf]
        %v278 = vld [vmem:[#allocation7 + $0x1c] sm:$0xf]
        %v279 = vld [vmem:[#allocation7 + $0x20] sm:$0xf]
        %v280 = vld [vmem:[#allocation7 + $0x24] sm:$0xf]
        %v281 = vld [vmem:[#allocation7 + $0x28] sm:$0xf]
        %v282 = vld [vmem:[#allocation7 + $0x2c] sm:$0xf]
        %v283 = vld [vmem:[#allocation7 + $0x30] sm:$0xf]
        %v284 = vld [vmem:[#allocation7 + $0x34] sm:$0xf]
        %v285 = vld [vmem:[#allocation7 + $0x38] sm:$0xf]
        %v286 = vld [vmem:[#allocation7 + $0x3c] sm:$0xf]
        %s287 = scalar_lea.vmem [#allocation7], 64
        %v288 = vld [vmem:[%s287] sm:$0xf]
        %v289 = vld [vmem:[%s287 + $0x4] sm:$0xf]
        %v290 = vld [vmem:[%s287 + $0x8] sm:$0xf]
        %v291 = vld [vmem:[%s287 + $0xc] sm:$0xf]
        %v292 = vld [vmem:[%s287 + $0x10] sm:$0xf]
        %v293 = vld [vmem:[%s287 + $0x14] sm:$0xf]
        %v294 = vld [vmem:[%s287 + $0x18] sm:$0xf]
        %v295 = vld [vmem:[%s287 + $0x1c] sm:$0xf]
        %v296 = vld [vmem:[%s287 + $0x20] sm:$0xf]
        %v297 = vld [vmem:[%s287 + $0x24] sm:$0xf]
        %v298 = vld [vmem:[%s287 + $0x28] sm:$0xf]
        %v299 = vld [vmem:[%s287 + $0x2c] sm:$0xf]
        %v300 = vld [vmem:[%s287 + $0x30] sm:$0xf]
        %v301 = vld [vmem:[%s287 + $0x34] sm:$0xf]
        %v302 = vld [vmem:[%s287 + $0x38] sm:$0xf]
        %v303 = vld [vmem:[%s287 + $0x3c] sm:$0xf]
        %s304 = scalar_lea.vmem [#allocation7], 128
        %v305 = vld [vmem:[%s304] sm:$0xf]
        %v306 = vld [vmem:[%s304 + $0x4] sm:$0xf]
        %v307 = vld [vmem:[%s304 + $0x8] sm:$0xf]
        %v308 = vld [vmem:[%s304 + $0xc] sm:$0xf]
        %v309 = vld [vmem:[%s304 + $0x10] sm:$0xf]
        %v310 = vld [vmem:[%s304 + $0x14] sm:$0xf]
        %v311 = vld [vmem:[%s304 + $0x18] sm:$0xf]
        %v312 = vld [vmem:[%s304 + $0x1c] sm:$0xf]
        %v313 = vld [vmem:[%s304 + $0x20] sm:$0xf]
        %v314 = vld [vmem:[%s304 + $0x24] sm:$0xf]
        %v315 = vld [vmem:[%s304 + $0x28] sm:$0xf]
        %v316 = vld [vmem:[%s304 + $0x2c] sm:$0xf]
        %v317 = vld [vmem:[%s304 + $0x30] sm:$0xf]
        %v318 = vld [vmem:[%s304 + $0x34] sm:$0xf]
        %v319 = vld [vmem:[%s304 + $0x38] sm:$0xf]
        %v320 = vld [vmem:[%s304 + $0x3c] sm:$0xf]
        %s321 = scalar_lea.vmem [#allocation7], 192
        %v322 = vld [vmem:[%s321] sm:$0xf]
        %v323 = vld [vmem:[%s321 + $0x4] sm:$0xf]
        %v324 = vld [vmem:[%s321 + $0x8] sm:$0xf]
        %v325 = vld [vmem:[%s321 + $0xc] sm:$0xf]
        %v326 = vld [vmem:[%s321 + $0x10] sm:$0xf]
        %v327 = vld [vmem:[%s321 + $0x14] sm:$0xf]
        %v328 = vld [vmem:[%s321 + $0x18] sm:$0xf]
        %v329 = vld [vmem:[%s321 + $0x1c] sm:$0xf]
        %v330 = vld [vmem:[%s321 + $0x20] sm:$0xf]
        %v331 = vld [vmem:[%s321 + $0x24] sm:$0xf]
        %v332 = vld [vmem:[%s321 + $0x28] sm:$0xf]
        %v333 = vld [vmem:[%s321 + $0x2c] sm:$0xf]
        %v334 = vld [vmem:[%s321 + $0x30] sm:$0xf]
        %v335 = vld [vmem:[%s321 + $0x34] sm:$0xf]
        %v336 = vld [vmem:[%s321 + $0x38] sm:$0xf]
        %v337 = vld [vmem:[%s321 + $0x3c] sm:$0xf]
        %v338 = vld [vmem:[#allocation8] sm:$0xf]
        %v339 = vld [vmem:[#allocation8 + $0x4] sm:$0xf]
        %s340 = scalar_lea.vmem [#allocation8], 8
        %v341 = vld [vmem:[%s340] sm:$0xf]
        %v342 = vld [vmem:[%s340 + $0x4] sm:$0xf]
        %v343 = vld [vmem:[%s222] sm:$0xf]
        %v344 = vld [vmem:[%s222 + $0x4] sm:$0xf]
        %s345 = scalar_lea.vmem %s222, 8 [#allocation2]
        %v346 = vld [vmem:[%s345] sm:$0xf]
        %v347 = vld [vmem:[%s345 + $0x4] sm:$0xf]
        %v350 = vunpack.c.l.b16 %v343
        %v351 = vunpack.c.l.b16 %v344
        %v352 = vpack.c.b16 %v351, %v350
        %v370 = vunpack.c.l.b16 %v271
        %v371 = vunpack.c.l.b16 %v272
        %v372 = vunpack.c.l.b16 %v273
        %v373 = vunpack.c.l.b16 %v274
        %v374 = vunpack.c.l.b16 %v275
        %v375 = vunpack.c.l.b16 %v276
        %v376 = vunpack.c.l.b16 %v277
        %v377 = vunpack.c.l.b16 %v278
        %v378 = vunpack.c.l.b16 %v279
        %v379 = vunpack.c.l.b16 %v280
        %v380 = vunpack.c.l.b16 %v281
        %v381 = vunpack.c.l.b16 %v282
        %v382 = vunpack.c.l.b16 %v283
        %v383 = vunpack.c.l.b16 %v284
        %v384 = vunpack.c.l.b16 %v285
        %v385 = vunpack.c.l.b16 %v286
        %v386 = vpack.c.b16 %v371, %v370
        %v387 = vpack.c.b16 %v373, %v372
        %v388 = vpack.c.b16 %v375, %v374
        %v389 = vpack.c.b16 %v377, %v376
        %v390 = vpack.c.b16 %v379, %v378
        %v391 = vpack.c.b16 %v381, %v380
        %v392 = vpack.c.b16 %v383, %v382
        %v393 = vpack.c.b16 %v385, %v384
        %402 = vmatprep.subr.bf16.mxu0 0
        %403 = vmatpush1.bf16.msra.mxu0 %v386
        %404 = vmatprep.subr.bf16.mxu0 0
        %405 = vmatpush1.bf16.msra.mxu0 %v387
        %406 = vmatprep.subr.bf16.mxu0 0
        %407 = vmatpush1.bf16.msra.mxu0 %v388
        %408 = vmatprep.subr.bf16.mxu0 0
        %409 = vmatpush1.bf16.msra.mxu0 %v389
        %410 = vmatprep.subr.bf16.mxu0 0
        %411 = vmatpush1.bf16.msra.mxu0 %v390
        %412 = vmatprep.subr.bf16.mxu0 0
        %413 = vmatpush1.bf16.msra.mxu0 %v391
        %414 = vmatprep.subr.bf16.mxu0 0
        %415 = vmatpush1.bf16.msra.mxu0 %v392
        %416 = vmatprep.subr.bf16.mxu0 0
        %417 = vmatpush1.bf16.msra.mxu0 %v393
        %418 = vmatprep.subr.bf16.mxu0 0
        %419 = vmatpush1.bf16.msra.mxu0 0
        %420 = vmatprep.subr.bf16.mxu0 0
        %421 = vmatpush1.bf16.msra.mxu0 0
        %422 = vmatprep.subr.bf16.mxu0 0
        %423 = vmatpush1.bf16.msra.mxu0 0
        %424 = vmatprep.subr.bf16.mxu0 0
        %425 = vmatpush1.bf16.msra.mxu0 0
        %426 = vmatprep.subr.bf16.mxu0 0
        %427 = vmatpush1.bf16.msra.mxu0 0
        %428 = vmatprep.subr.bf16.mxu0 0
        %429 = vmatpush1.bf16.msra.mxu0 0
        %430 = vmatprep.subr.bf16.mxu0 0
        %431 = vmatpush1.bf16.msra.mxu0 0
        %432 = vmatprep.subr.bf16.mxu0 0
        %433 = vmatpush1.bf16.msra.mxu0 0
        %434 = vmatprep.mubr.bf16.mxu0 0
        %435 = vmatmul.mubr.bf16.gmra.mrb[0].mxu0 %v352
        %v436 = vpop.f32.mrb[0].mxu0
        %v437 = vadd.f32 0.0, %v436
        %v438 = vpop.f32.mrb[0].mxu0
        %v439 = vpop.f32.mrb[0].mxu0
        %v440 = vadd.f32 0.0, %v439
        %v441 = vpop.f32.mrb[0].mxu0
        %442 = vdwg.mxu0
        %v445 = vunpack.c.l.b16 %v346
        %v446 = vunpack.c.l.b16 %v347
        %v447 = vpack.c.b16 %v446, %v445
        %v465 = vunpack.c.l.b16 %v288
        %v466 = vunpack.c.l.b16 %v289
        %v467 = vunpack.c.l.b16 %v290
        %v468 = vunpack.c.l.b16 %v291
        %v469 = vunpack.c.l.b16 %v292
        %v470 = vunpack.c.l.b16 %v293
        %v471 = vunpack.c.l.b16 %v294
        %v472 = vunpack.c.l.b16 %v295
        %v473 = vunpack.c.l.b16 %v296
        %v474 = vunpack.c.l.b16 %v297
        %v475 = vunpack.c.l.b16 %v298
        %v476 = vunpack.c.l.b16 %v299
        %v477 = vunpack.c.l.b16 %v300
        %v478 = vunpack.c.l.b16 %v301
        %v479 = vunpack.c.l.b16 %v302
        %v480 = vunpack.c.l.b16 %v303
        %v481 = vpack.c.b16 %v466, %v465
        %v482 = vpack.c.b16 %v468, %v467
        %v483 = vpack.c.b16 %v470, %v469
        %v484 = vpack.c.b16 %v472, %v471
        %v485 = vpack.c.b16 %v474, %v473
        %v486 = vpack.c.b16 %v476, %v475
        %v487 = vpack.c.b16 %v478, %v477
        %v488 = vpack.c.b16 %v480, %v479
        %497 = vmatprep.subr.bf16.mxu0 0
        %498 = vmatpush1.bf16.msra.mxu0 %v481
        %499 = vmatprep.subr.bf16.mxu0 0
        %500 = vmatpush1.bf16.msra.mxu0 %v482
        %501 = vmatprep.subr.bf16.mxu0 0
        %502 = vmatpush1.bf16.msra.mxu0 %v483
        %503 = vmatprep.subr.bf16.mxu0 0
        %504 = vmatpush1.bf16.msra.mxu0 %v484
        %505 = vmatprep.subr.bf16.mxu0 0
        %506 = vmatpush1.bf16.msra.mxu0 %v485
        %507 = vmatprep.subr.bf16.mxu0 0
        %508 = vmatpush1.bf16.msra.mxu0 %v486
        %509 = vmatprep.subr.bf16.mxu0 0
        %510 = vmatpush1.bf16.msra.mxu0 %v487
        %511 = vmatprep.subr.bf16.mxu0 0
        %512 = vmatpush1.bf16.msra.mxu0 %v488
        %513 = vmatprep.subr.bf16.mxu0 0
        %514 = vmatpush1.bf16.msra.mxu0 0
        %515 = vmatprep.subr.bf16.mxu0 0
        %516 = vmatpush1.bf16.msra.mxu0 0
        %517 = vmatprep.subr.bf16.mxu0 0
        %518 = vmatpush1.bf16.msra.mxu0 0
        %519 = vmatprep.subr.bf16.mxu0 0
        %520 = vmatpush1.bf16.msra.mxu0 0
        %521 = vmatprep.subr.bf16.mxu0 0
        %522 = vmatpush1.bf16.msra.mxu0 0
        %523 = vmatprep.subr.bf16.mxu0 0
        %524 = vmatpush1.bf16.msra.mxu0 0
        %525 = vmatprep.subr.bf16.mxu0 0
        %526 = vmatpush1.bf16.msra.mxu0 0
        %527 = vmatprep.subr.bf16.mxu0 0
        %528 = vmatpush1.bf16.msra.mxu0 0
        %529 = vmatprep.mubr.bf16.mxu0 0
        %530 = vmatmul.mubr.bf16.gmra.mrb[0].mxu0 %v447
        %v531 = vpop.f32.mrb[0].mxu0
        %v532 = vadd.f32 0.0, %v531
        %v533 = vpop.f32.mrb[0].mxu0
        %v534 = vpop.f32.mrb[0].mxu0
        %v535 = vadd.f32 0.0, %v534
        %v536 = vpop.f32.mrb[0].mxu0
        %537 = vdwg.mxu0
        %v538 = vadd.bf16 %v343, %v346
        %v539 = vadd.bf16 %v344, %v347
        %v542 = vunpack.c.l.b16 %v538
        %v543 = vunpack.c.l.b16 %v539
        %v544 = vpack.c.b16 %v543, %v542
        %v562 = vunpack.c.l.b16 %v305
        %v563 = vunpack.c.l.b16 %v306
        %v564 = vunpack.c.l.b16 %v307
        %v565 = vunpack.c.l.b16 %v308
        %v566 = vunpack.c.l.b16 %v309
        %v567 = vunpack.c.l.b16 %v310
        %v568 = vunpack.c.l.b16 %v311
        %v569 = vunpack.c.l.b16 %v312
        %v570 = vunpack.c.l.b16 %v313
        %v571 = vunpack.c.l.b16 %v314
        %v572 = vunpack.c.l.b16 %v315
        %v573 = vunpack.c.l.b16 %v316
        %v574 = vunpack.c.l.b16 %v317
        %v575 = vunpack.c.l.b16 %v318
        %v576 = vunpack.c.l.b16 %v319
        %v577 = vunpack.c.l.b16 %v320
        %v578 = vpack.c.b16 %v563, %v562
        %v579 = vpack.c.b16 %v565, %v564
        %v580 = vpack.c.b16 %v567, %v566
        %v581 = vpack.c.b16 %v569, %v568
        %v582 = vpack.c.b16 %v571, %v570
        %v583 = vpack.c.b16 %v573, %v572
        %v584 = vpack.c.b16 %v575, %v574
        %v585 = vpack.c.b16 %v577, %v576
        %594 = vmatprep.subr.bf16.mxu0 0
        %595 = vmatpush1.bf16.msra.mxu0 %v578
        %596 = vmatprep.subr.bf16.mxu0 0
        %597 = vmatpush1.bf16.msra.mxu0 %v579
        %598 = vmatprep.subr.bf16.mxu0 0
        %599 = vmatpush1.bf16.msra.mxu0 %v580
        %600 = vmatprep.subr.bf16.mxu0 0
        %601 = vmatpush1.bf16.msra.mxu0 %v581
        %602 = vmatprep.subr.bf16.mxu0 0
        %603 = vmatpush1.bf16.msra.mxu0 %v582
        %604 = vmatprep.subr.bf16.mxu0 0
        %605 = vmatpush1.bf16.msra.mxu0 %v583
        %606 = vmatprep.subr.bf16.mxu0 0
        %607 = vmatpush1.bf16.msra.mxu0 %v584
        %608 = vmatprep.subr.bf16.mxu0 0
        %609 = vmatpush1.bf16.msra.mxu0 %v585
        %610 = vmatprep.subr.bf16.mxu0 0
        %611 = vmatpush1.bf16.msra.mxu0 0
        %612 = vmatprep.subr.bf16.mxu0 0
        %613 = vmatpush1.bf16.msra.mxu0 0
        %614 = vmatprep.subr.bf16.mxu0 0
        %615 = vmatpush1.bf16.msra.mxu0 0
        %616 = vmatprep.subr.bf16.mxu0 0
        %617 = vmatpush1.bf16.msra.mxu0 0
        %618 = vmatprep.subr.bf16.mxu0 0
        %619 = vmatpush1.bf16.msra.mxu0 0
        %620 = vmatprep.subr.bf16.mxu0 0
        %621 = vmatpush1.bf16.msra.mxu0 0
        %622 = vmatprep.subr.bf16.mxu0 0
        %623 = vmatpush1.bf16.msra.mxu0 0
        %624 = vmatprep.subr.bf16.mxu0 0
        %625 = vmatpush1.bf16.msra.mxu0 0
        %626 = vmatprep.mubr.bf16.mxu0 0
        %627 = vmatmul.mubr.bf16.gmra.mrb[0].mxu0 %v544
        %v628 = vpop.f32.mrb[0].mxu0
        %v629 = vadd.f32 0.0, %v628
        %v630 = vpop.f32.mrb[0].mxu0
        %v631 = vpop.f32.mrb[0].mxu0
        %v632 = vadd.f32 0.0, %v631
        %v633 = vpop.f32.mrb[0].mxu0
        %634 = vdwg.mxu0
        %v635 = vsub.f32 %v437, %v532
        %v636 = vsub.f32 %v440, %v535
        %v637 = vsub.f32 %v629, %v437
        %v638 = vsub.f32 %v632, %v440
        %v639 = vsub.f32 %v637, %v532
        %v640 = vsub.f32 %v638, %v535
        %v641 = vpack.c.bf16 %v636, %v635
        %v642 = vpack.c.bf16 %v640, %v639
        %v645 = vunpack.c.l.b16 %v260
        %v646 = vunpack.c.l.b16 %v261
        %v647 = vpack.c.b16 %v646, %v645
        %vm648 = vcmask 130048
        %v650 = vsel %vm648, %v647, 0
        %652 = vmatprep.subr.bf16.mxu0 0
        %653 = vmatpush1.bf16.msra.mxu0 %v641
        %654 = vmatprep.subr.bf16.mxu0 0
        %655 = vmatpush1.bf16.msra.mxu0 0
        %656 = vmatprep.subr.bf16.mxu0 0
        %657 = vmatpush1.bf16.msra.mxu0 0
        %658 = vmatprep.subr.bf16.mxu0 0
        %659 = vmatpush1.bf16.msra.mxu0 0
        %660 = vmatprep.subr.bf16.mxu0 0
        %661 = vmatpush1.bf16.msra.mxu0 0
        %662 = vmatprep.subr.bf16.mxu0 0
        %663 = vmatpush1.bf16.msra.mxu0 0
        %664 = vmatprep.subr.bf16.mxu0 0
        %665 = vmatpush1.bf16.msra.mxu0 0
        %666 = vmatprep.subr.bf16.mxu0 0
        %667 = vmatpush1.bf16.msra.mxu0 0
        %668 = vmatprep.subr.bf16.mxu0 0
        %669 = vmatpush1.bf16.msra.mxu0 0
        %670 = vmatprep.subr.bf16.mxu0 0
        %671 = vmatpush1.bf16.msra.mxu0 0
        %672 = vmatprep.subr.bf16.mxu0 0
        %673 = vmatpush1.bf16.msra.mxu0 0
        %674 = vmatprep.subr.bf16.mxu0 0
        %675 = vmatpush1.bf16.msra.mxu0 0
        %676 = vmatprep.subr.bf16.mxu0 0
        %677 = vmatpush1.bf16.msra.mxu0 0
        %678 = vmatprep.subr.bf16.mxu0 0
        %679 = vmatpush1.bf16.msra.mxu0 0
        %680 = vmatprep.subr.bf16.mxu0 0
        %681 = vmatpush1.bf16.msra.mxu0 0
        %682 = vmatprep.subr.bf16.mxu0 0
        %683 = vmatpush1.bf16.msra.mxu0 0
        %684 = vmatprep.mubr.bf16.mxu0 0
        %685 = vmatmul.mubr.bf16.gmra.mrb[0].mxu0 %v650
        %v686 = vpop.f32.mrb[0].mxu0
        %v687 = vadd.f32 0.0, %v686
        %v688 = vpop.f32.mrb[0].mxu0
        %v689 = vpop.f32.mrb[0].mxu0
        %v690 = vadd.f32 0.0, %v689
        %v691 = vpop.f32.mrb[0].mxu0
        %692 = vdwg.mxu0
        %v695 = vunpack.c.l.b16 %v263
        %v696 = vunpack.c.l.b16 %v264
        %v697 = vpack.c.b16 %v696, %v695
        %v699 = vsel %vm648, %v697, 0
        %701 = vmatprep.subr.bf16.mxu0 0
        %702 = vmatpush1.bf16.msra.mxu0 %v642
        %703 = vmatprep.subr.bf16.mxu0 0
        %704 = vmatpush1.bf16.msra.mxu0 0
        %705 = vmatprep.subr.bf16.mxu0 0
        %706 = vmatpush1.bf16.msra.mxu0 0
        %707 = vmatprep.subr.bf16.mxu0 0
        %708 = vmatpush1.bf16.msra.mxu0 0
        %709 = vmatprep.subr.bf16.mxu0 0
        %710 = vmatpush1.bf16.msra.mxu0 0
        %711 = vmatprep.subr.bf16.mxu0 0
        %712 = vmatpush1.bf16.msra.mxu0 0
        %713 = vmatprep.subr.bf16.mxu0 0
        %714 = vmatpush1.bf16.msra.mxu0 0
        %715 = vmatprep.subr.bf16.mxu0 0
        %716 = vmatpush1.bf16.msra.mxu0 0
        %717 = vmatprep.subr.bf16.mxu0 0
        %718 = vmatpush1.bf16.msra.mxu0 0
        %719 = vmatprep.subr.bf16.mxu0 0
        %720 = vmatpush1.bf16.msra.mxu0 0
        %721 = vmatprep.subr.bf16.mxu0 0
        %722 = vmatpush1.bf16.msra.mxu0 0
        %723 = vmatprep.subr.bf16.mxu0 0
        %724 = vmatpush1.bf16.msra.mxu0 0
        %725 = vmatprep.subr.bf16.mxu0 0
        %726 = vmatpush1.bf16.msra.mxu0 0
        %727 = vmatprep.subr.bf16.mxu0 0
        %728 = vmatpush1.bf16.msra.mxu0 0
        %729 = vmatprep.subr.bf16.mxu0 0
        %730 = vmatpush1.bf16.msra.mxu0 0
        %731 = vmatprep.subr.bf16.mxu0 0
        %732 = vmatpush1.bf16.msra.mxu0 0
        %733 = vmatprep.mubr.bf16.mxu0 0
        %734 = vmatmul.mubr.bf16.gmra.mrb[0].mxu0 %v699
        %v735 = vpop.f32.mrb[0].mxu0
        %v736 = vadd.f32 0.0, %v735
        %v737 = vpop.f32.mrb[0].mxu0
        %v738 = vpop.f32.mrb[0].mxu0
        %v739 = vadd.f32 0.0, %v738
        %v740 = vpop.f32.mrb[0].mxu0
        %741 = vdwg.mxu0
        %v742 = vadd.bf16 %v641, %v642
        %v745 = vunpack.c.l.b16 %v266
        %v746 = vunpack.c.l.b16 %v267
        %v747 = vpack.c.b16 %v746, %v745
        %v749 = vsel %vm648, %v747, 0
        %751 = vmatprep.subr.bf16.mxu0 0
        %752 = vmatpush1.bf16.msra.mxu0 %v742
        %753 = vmatprep.subr.bf16.mxu0 0
        %754 = vmatpush1.bf16.msra.mxu0 0
        %755 = vmatprep.subr.bf16.mxu0 0
        %756 = vmatpush1.bf16.msra.mxu0 0
        %757 = vmatprep.subr.bf16.mxu0 0
        %758 = vmatpush1.bf16.msra.mxu0 0
        %759 = vmatprep.subr.bf16.mxu0 0
        %760 = vmatpush1.bf16.msra.mxu0 0
        %761 = vmatprep.subr.bf16.mxu0 0
        %762 = vmatpush1.bf16.msra.mxu0 0
        %763 = vmatprep.subr.bf16.mxu0 0
        %764 = vmatpush1.bf16.msra.mxu0 0
        %765 = vmatprep.subr.bf16.mxu0 0
        %766 = vmatpush1.bf16.msra.mxu0 0
        %767 = vmatprep.subr.bf16.mxu0 0
        %768 = vmatpush1.bf16.msra.mxu0 0
        %769 = vmatprep.subr.bf16.mxu0 0
        %770 = vmatpush1.bf16.msra.mxu0 0
        %771 = vmatprep.subr.bf16.mxu0 0
        %772 = vmatpush1.bf16.msra.mxu0 0
        %773 = vmatprep.subr.bf16.mxu0 0
        %774 = vmatpush1.bf16.msra.mxu0 0
        %775 = vmatprep.subr.bf16.mxu0 0
        %776 = vmatpush1.bf16.msra.mxu0 0
        %777 = vmatprep.subr.bf16.mxu0 0
        %778 = vmatpush1.bf16.msra.mxu0 0
        %779 = vmatprep.subr.bf16.mxu0 0
        %780 = vmatpush1.bf16.msra.mxu0 0
        %781 = vmatprep.subr.bf16.mxu0 0
        %782 = vmatpush1.bf16.msra.mxu0 0
        %783 = vmatprep.mubr.bf16.mxu0 0
        %784 = vmatmul.mubr.bf16.gmra.mrb[0].mxu0 %v749
        %v785 = vpop.f32.mrb[0].mxu0
        %v786 = vadd.f32 0.0, %v785
        %v787 = vpop.f32.mrb[0].mxu0
        %v788 = vpop.f32.mrb[0].mxu0
        %v789 = vadd.f32 0.0, %v788
        %v790 = vpop.f32.mrb[0].mxu0
        %791 = vdwg.mxu0
        %v792 = vsub.f32 %v687, %v736
        %v793 = vsub.f32 %v690, %v739
        %v794 = vsub.f32 %v786, %v687
        %v795 = vsub.f32 %v789, %v690
        %v796 = vsub.f32 %v794, %v736
        %v797 = vsub.f32 %v795, %v739
        %v798 = vunpack.c.l.bf16 %v338
        %v799 = vunpack.c.l.bf16 %v339
        %v800 = vmul.f32 %v798, %v792
        %v801 = vmul.f32 %v799, %v793
        %v802 = vunpack.c.l.bf16 %v341
        %v803 = vunpack.c.l.bf16 %v342
        %v804 = vmul.f32 %v802, %v796
        %v805 = vmul.f32 %v803, %v797
        %v806 = vsub.f32 %v800, %v804
        %v807 = vsub.f32 %v801, %v805
        %v808 = vmul.f32 %v798, %v796
        %v809 = vmul.f32 %v799, %v797
        %v810 = vmul.f32 %v802, %v792
        %v811 = vmul.f32 %v803, %v793
        %v812 = vadd.f32 %v808, %v810
        %v813 = vadd.f32 %v809, %v811
        %v814 = vpack.c.bf16 %v807, %v806
        %v815 = vpack.c.bf16 %v813, %v812
        %816 = vmatprep.subr.bf16.mxu0 0
        %817 = vmatpush1.bf16.msra.mxu0 %v386
        %818 = vmatprep.subr.bf16.mxu0 0
        %819 = vmatpush1.bf16.msra.mxu0 %v387
        %820 = vmatprep.subr.bf16.mxu0 0
        %821 = vmatpush1.bf16.msra.mxu0 %v388
        %822 = vmatprep.subr.bf16.mxu0 0
        %823 = vmatpush1.bf16.msra.mxu0 %v389
        %824 = vmatprep.subr.bf16.mxu0 0
        %825 = vmatpush1.bf16.msra.mxu0 %v390
        %826 = vmatprep.subr.bf16.mxu0 0
        %827 = vmatpush1.bf16.msra.mxu0 %v391
        %828 = vmatprep.subr.bf16.mxu0 0
        %829 = vmatpush1.bf16.msra.mxu0 %v392
        %830 = vmatprep.subr.bf16.mxu0 0
        %831 = vmatpush1.bf16.msra.mxu0 %v393
        %832 = vmatprep.subr.bf16.mxu0 0
        %833 = vmatpush1.bf16.msra.mxu0 0
        %834 = vmatprep.subr.bf16.mxu0 0
        %835 = vmatpush1.bf16.msra.mxu0 0
        %836 = vmatprep.subr.bf16.mxu0 0
        %837 = vmatpush1.bf16.msra.mxu0 0
        %838 = vmatprep.subr.bf16.mxu0 0
        %839 = vmatpush1.bf16.msra.mxu0 0
        %840 = vmatprep.subr.bf16.mxu0 0
        %841 = vmatpush1.bf16.msra.mxu0 0
        %842 = vmatprep.subr.bf16.mxu0 0
        %843 = vmatpush1.bf16.msra.mxu0 0
        %844 = vmatprep.subr.bf16.mxu0 0
        %845 = vmatpush1.bf16.msra.mxu0 0
        %846 = vmatprep.subr.bf16.mxu0 0
        %847 = vmatpush1.bf16.msra.mxu0 0
        %848 = vmatprep.mubr.bf16.mxu0 0
        %849 = vmatmul.mubr.bf16.gmra.mrb[0].mxu0 %v814
        %v850 = vpop.f32.mrb[0].mxu0
        %v851 = vadd.f32 0.0, %v850
        %v852 = vpop.f32.mrb[0].mxu0
        %v853 = vpop.f32.mrb[0].mxu0
        %v854 = vadd.f32 0.0, %v853
        %v855 = vpop.f32.mrb[0].mxu0
        %856 = vdwg.mxu0
        %857 = vmatprep.subr.bf16.mxu0 0
        %858 = vmatpush1.bf16.msra.mxu0 %v481
        %859 = vmatprep.subr.bf16.mxu0 0
        %860 = vmatpush1.bf16.msra.mxu0 %v482
        %861 = vmatprep.subr.bf16.mxu0 0
        %862 = vmatpush1.bf16.msra.mxu0 %v483
        %863 = vmatprep.subr.bf16.mxu0 0
        %864 = vmatpush1.bf16.msra.mxu0 %v484
        %865 = vmatprep.subr.bf16.mxu0 0
        %866 = vmatpush1.bf16.msra.mxu0 %v485
        %867 = vmatprep.subr.bf16.mxu0 0
        %868 = vmatpush1.bf16.msra.mxu0 %v486
        %869 = vmatprep.subr.bf16.mxu0 0
        %870 = vmatpush1.bf16.msra.mxu0 %v487
        %871 = vmatprep.subr.bf16.mxu0 0
        %872 = vmatpush1.bf16.msra.mxu0 %v488
        %873 = vmatprep.subr.bf16.mxu0 0
        %874 = vmatpush1.bf16.msra.mxu0 0
        %875 = vmatprep.subr.bf16.mxu0 0
        %876 = vmatpush1.bf16.msra.mxu0 0
        %877 = vmatprep.subr.bf16.mxu0 0
        %878 = vmatpush1.bf16.msra.mxu0 0
        %879 = vmatprep.subr.bf16.mxu0 0
        %880 = vmatpush1.bf16.msra.mxu0 0
        %881 = vmatprep.subr.bf16.mxu0 0
        %882 = vmatpush1.bf16.msra.mxu0 0
        %883 = vmatprep.subr.bf16.mxu0 0
        %884 = vmatpush1.bf16.msra.mxu0 0
        %885 = vmatprep.subr.bf16.mxu0 0
        %886 = vmatpush1.bf16.msra.mxu0 0
        %887 = vmatprep.subr.bf16.mxu0 0
        %888 = vmatpush1.bf16.msra.mxu0 0
        %889 = vmatprep.mubr.bf16.mxu0 0
        %890 = vmatmul.mubr.bf16.gmra.mrb[0].mxu0 %v815
        %v891 = vpop.f32.mrb[0].mxu0
        %v892 = vadd.f32 0.0, %v891
        %v893 = vpop.f32.mrb[0].mxu0
        %v894 = vpop.f32.mrb[0].mxu0
        %v895 = vadd.f32 0.0, %v894
        %v896 = vpop.f32.mrb[0].mxu0
        %897 = vdwg.mxu0
        %v898 = vadd.bf16 %v814, %v815
        %v915 = vunpack.c.l.b16 %v322
        %v916 = vunpack.c.l.b16 %v323
        %v917 = vunpack.c.l.b16 %v324
        %v918 = vunpack.c.l.b16 %v325
        %v919 = vunpack.c.l.b16 %v326
        %v920 = vunpack.c.l.b16 %v327
        %v921 = vunpack.c.l.b16 %v328
        %v922 = vunpack.c.l.b16 %v329
        %v923 = vunpack.c.l.b16 %v330
        %v924 = vunpack.c.l.b16 %v331
        %v925 = vunpack.c.l.b16 %v332
        %v926 = vunpack.c.l.b16 %v333
        %v927 = vunpack.c.l.b16 %v334
        %v928 = vunpack.c.l.b16 %v335
        %v929 = vunpack.c.l.b16 %v336
        %v930 = vunpack.c.l.b16 %v337
        %v931 = vpack.c.b16 %v916, %v915
        %v932 = vpack.c.b16 %v918, %v917
        %v933 = vpack.c.b16 %v920, %v919
        %v934 = vpack.c.b16 %v922, %v921
        %v935 = vpack.c.b16 %v924, %v923
        %v936 = vpack.c.b16 %v926, %v925
        %v937 = vpack.c.b16 %v928, %v927
        %v938 = vpack.c.b16 %v930, %v929
        %947 = vmatprep.subr.bf16.mxu0 0
        %948 = vmatpush1.bf16.msra.mxu0 %v931
        %949 = vmatprep.subr.bf16.mxu0 0
        %950 = vmatpush1.bf16.msra.mxu0 %v932
        %951 = vmatprep.subr.bf16.mxu0 0
        %952 = vmatpush1.bf16.msra.mxu0 %v933
        %953 = vmatprep.subr.bf16.mxu0 0
        %954 = vmatpush1.bf16.msra.mxu0 %v934
        %955 = vmatprep.subr.bf16.mxu0 0
        %956 = vmatpush1.bf16.msra.mxu0 %v935
        %957 = vmatprep.subr.bf16.mxu0 0
        %958 = vmatpush1.bf16.msra.mxu0 %v936
        %959 = vmatprep.subr.bf16.mxu0 0
        %960 = vmatpush1.bf16.msra.mxu0 %v937
        %961 = vmatprep.subr.bf16.mxu0 0
        %962 = vmatpush1.bf16.msra.mxu0 %v938
        %963 = vmatprep.subr.bf16.mxu0 0
        %964 = vmatpush1.bf16.msra.mxu0 0
        %965 = vmatprep.subr.bf16.mxu0 0
        %966 = vmatpush1.bf16.msra.mxu0 0
        %967 = vmatprep.subr.bf16.mxu0 0
        %968 = vmatpush1.bf16.msra.mxu0 0
        %969 = vmatprep.subr.bf16.mxu0 0
        %970 = vmatpush1.bf16.msra.mxu0 0
        %971 = vmatprep.subr.bf16.mxu0 0
        %972 = vmatpush1.bf16.msra.mxu0 0
        %973 = vmatprep.subr.bf16.mxu0 0
        %974 = vmatpush1.bf16.msra.mxu0 0
        %975 = vmatprep.subr.bf16.mxu0 0
        %976 = vmatpush1.bf16.msra.mxu0 0
        %977 = vmatprep.subr.bf16.mxu0 0
        %978 = vmatpush1.bf16.msra.mxu0 0
        %979 = vmatprep.mubr.bf16.mxu0 0
        %980 = vmatmul.mubr.bf16.gmra.mrb[0].mxu0 %v898
        %v981 = vpop.f32.mrb[0].mxu0
        %v982 = vadd.f32 0.0, %v981
        %v983 = vpop.f32.mrb[0].mxu0
        %v984 = vpop.f32.mrb[0].mxu0
        %v985 = vadd.f32 0.0, %v984
        %v986 = vpop.f32.mrb[0].mxu0
        %987 = vdwg.mxu0
        %v988 = vadd.f32 %v851, %v892
        %v989 = vadd.f32 %v854, %v895
        %v990 = vsub.f32 %v982, %v851
        %v991 = vsub.f32 %v985, %v854
        %v992 = vadd.f32 %v990, %v892
        %v993 = vadd.f32 %v991, %v895
        %v994 = vpack.c.bf16 %v989, %v988
        %v995 = vpack.c.bf16 %v993, %v992
        %996 = vmatprep.subr.bf16.mxu0 0
        %997 = vmatpush1.bf16.msra.mxu0 %v994
        %998 = vmatprep.subr.bf16.mxu0 0
        %999 = vmatpush1.bf16.msra.mxu0 0
        %1000 = vmatprep.subr.bf16.mxu0 0
        %1001 = vmatpush1.bf16.msra.mxu0 0
        %1002 = vmatprep.subr.bf16.mxu0 0
        %1003 = vmatpush1.bf16.msra.mxu0 0
        %1004 = vmatprep.subr.bf16.mxu0 0
        %1005 = vmatpush1.bf16.msra.mxu0 0
        %1006 = vmatprep.subr.bf16.mxu0 0
        %1007 = vmatpush1.bf16.msra.mxu0 0
        %1008 = vmatprep.subr.bf16.mxu0 0
        %1009 = vmatpush1.bf16.msra.mxu0 0
        %1010 = vmatprep.subr.bf16.mxu0 0
        %1011 = vmatpush1.bf16.msra.mxu0 0
        %1012 = vmatprep.subr.bf16.mxu0 0
        %1013 = vmatpush1.bf16.msra.mxu0 0
        %1014 = vmatprep.subr.bf16.mxu0 0
        %1015 = vmatpush1.bf16.msra.mxu0 0
        %1016 = vmatprep.subr.bf16.mxu0 0
        %1017 = vmatpush1.bf16.msra.mxu0 0
        %1018 = vmatprep.subr.bf16.mxu0 0
        %1019 = vmatpush1.bf16.msra.mxu0 0
        %1020 = vmatprep.subr.bf16.mxu0 0
        %1021 = vmatpush1.bf16.msra.mxu0 0
        %1022 = vmatprep.subr.bf16.mxu0 0
        %1023 = vmatpush1.bf16.msra.mxu0 0
        %1024 = vmatprep.subr.bf16.mxu0 0
        %1025 = vmatpush1.bf16.msra.mxu0 0
        %1026 = vmatprep.subr.bf16.mxu0 0
        %1027 = vmatpush1.bf16.msra.mxu0 0
        %1028 = vmatprep.mubr.bf16.mxu0 0
        %1029 = vmatmul.mubr.bf16.gmra.mrb[0].mxu0 %v650
        %v1030 = vpop.f32.mrb[0].mxu0
        %v1031 = vadd.f32 0.0, %v1030
        %v1032 = vpop.f32.mrb[0].mxu0
        %v1033 = vpop.f32.mrb[0].mxu0
        %v1034 = vadd.f32 0.0, %v1033
        %v1035 = vpop.f32.mrb[0].mxu0
        %1036 = vdwg.mxu0
        %1037 = vmatprep.subr.bf16.mxu0 0
        %1038 = vmatpush1.bf16.msra.mxu0 %v995
        %1039 = vmatprep.subr.bf16.mxu0 0
        %1040 = vmatpush1.bf16.msra.mxu0 0
        %1041 = vmatprep.subr.bf16.mxu0 0
        %1042 = vmatpush1.bf16.msra.mxu0 0
        %1043 = vmatprep.subr.bf16.mxu0 0
        %1044 = vmatpush1.bf16.msra.mxu0 0
        %1045 = vmatprep.subr.bf16.mxu0 0
        %1046 = vmatpush1.bf16.msra.mxu0 0
        %1047 = vmatprep.subr.bf16.mxu0 0
        %1048 = vmatpush1.bf16.msra.mxu0 0
        %1049 = vmatprep.subr.bf16.mxu0 0
        %1050 = vmatpush1.bf16.msra.mxu0 0
        %1051 = vmatprep.subr.bf16.mxu0 0
        %1052 = vmatpush1.bf16.msra.mxu0 0
        %1053 = vmatprep.subr.bf16.mxu0 0
        %1054 = vmatpush1.bf16.msra.mxu0 0
        %1055 = vmatprep.subr.bf16.mxu0 0
        %1056 = vmatpush1.bf16.msra.mxu0 0
        %1057 = vmatprep.subr.bf16.mxu0 0
        %1058 = vmatpush1.bf16.msra.mxu0 0
        %1059 = vmatprep.subr.bf16.mxu0 0
        %1060 = vmatpush1.bf16.msra.mxu0 0
        %1061 = vmatprep.subr.bf16.mxu0 0
        %1062 = vmatpush1.bf16.msra.mxu0 0
        %1063 = vmatprep.subr.bf16.mxu0 0
        %1064 = vmatpush1.bf16.msra.mxu0 0
        %1065 = vmatprep.subr.bf16.mxu0 0
        %1066 = vmatpush1.bf16.msra.mxu0 0
        %1067 = vmatprep.subr.bf16.mxu0 0
        %1068 = vmatpush1.bf16.msra.mxu0 0
        %1069 = vmatprep.mubr.bf16.mxu0 0
        %1070 = vmatmul.mubr.bf16.gmra.mrb[0].mxu0 %v699
        %v1071 = vpop.f32.mrb[0].mxu0
        %v1072 = vadd.f32 0.0, %v1071
        %v1073 = vpop.f32.mrb[0].mxu0
        %v1074 = vpop.f32.mrb[0].mxu0
        %v1075 = vadd.f32 0.0, %v1074
        %v1076 = vpop.f32.mrb[0].mxu0
        %1077 = vdwg.mxu0
        %v1078 = vadd.bf16 %v994, %v995
        %v1081 = vunpack.c.l.b16 %v269
        %v1082 = vunpack.c.l.b16 %v270
        %v1083 = vpack.c.b16 %v1082, %v1081
        %v1085 = vsel %vm648, %v1083, 0
        %1087 = vmatprep.subr.bf16.mxu0 0
        %1088 = vmatpush1.bf16.msra.mxu0 %v1078
        %1089 = vmatprep.subr.bf16.mxu0 0
        %1090 = vmatpush1.bf16.msra.mxu0 0
        %1091 = vmatprep.subr.bf16.mxu0 0
        %1092 = vmatpush1.bf16.msra.mxu0 0
        %1093 = vmatprep.subr.bf16.mxu0 0
        %1094 = vmatpush1.bf16.msra.mxu0 0
        %1095 = vmatprep.subr.bf16.mxu0 0
        %1096 = vmatpush1.bf16.msra.mxu0 0
        %1097 = vmatprep.subr.bf16.mxu0 0
        %1098 = vmatpush1.bf16.msra.mxu0 0
        %1099 = vmatprep.subr.bf16.mxu0 0
        %1100 = vmatpush1.bf16.msra.mxu0 0
        %1101 = vmatprep.subr.bf16.mxu0 0
        %1102 = vmatpush1.bf16.msra.mxu0 0
        %1103 = vmatprep.subr.bf16.mxu0 0
        %1104 = vmatpush1.bf16.msra.mxu0 0
        %1105 = vmatprep.subr.bf16.mxu0 0
        %1106 = vmatpush1.bf16.msra.mxu0 0
        %1107 = vmatprep.subr.bf16.mxu0 0
        %1108 = vmatpush1.bf16.msra.mxu0 0
        %1109 = vmatprep.subr.bf16.mxu0 0
        %1110 = vmatpush1.bf16.msra.mxu0 0
        %1111 = vmatprep.subr.bf16.mxu0 0
        %1112 = vmatpush1.bf16.msra.mxu0 0
        %1113 = vmatprep.subr.bf16.mxu0 0
        %1114 = vmatpush1.bf16.msra.mxu0 0
        %1115 = vmatprep.subr.bf16.mxu0 0
        %1116 = vmatpush1.bf16.msra.mxu0 0
        %1117 = vmatprep.subr.bf16.mxu0 0
        %1118 = vmatpush1.bf16.msra.mxu0 0
        %1119 = vmatprep.mubr.bf16.mxu0 0
        %1120 = vmatmul.mubr.bf16.gmra.mrb[0].mxu0 %v1085
        %v1121 = vpop.f32.mrb[0].mxu0
        %v1122 = vadd.f32 0.0, %v1121
        %v1123 = vpop.f32.mrb[0].mxu0
        %v1124 = vpop.f32.mrb[0].mxu0
        %v1125 = vadd.f32 0.0, %v1124
        %v1126 = vpop.f32.mrb[0].mxu0
        %1127 = vdwg.mxu0
        %v1128 = vadd.f32 %v1031, %v1072
        %v1129 = vadd.f32 %v1034, %v1075
        %v1130 = vsub.f32 %v1122, %v1031
        %v1131 = vsub.f32 %v1125, %v1034
        %v1132 = vadd.f32 %v1130, %v1072
        %v1133 = vadd.f32 %v1131, %v1075
        %v1134 = vpack.c.bf16 %v1129, %v1128
        %v1136 = vunpack.c.l.b16 %v1134
        %v1137 = vunpack.c.h.b16 %v1134
        %v1138 = vpack.c.b16 %v1136, %v1136
        %v1139 = vpack.c.b16 %v1137, %v1137
        %1142 = vst [vmem:[%s258] sm:$0xf] %v1138
        %1143 = vst [vmem:[%s258 + $0x4] sm:$0xf] %v1139
        %v1144 = vpack.c.bf16 %v1133, %v1132
        %v1146 = vunpack.c.l.b16 %v1144
        %v1147 = vunpack.c.h.b16 %v1144
        %v1148 = vpack.c.b16 %v1146, %v1146
        %v1149 = vpack.c.b16 %v1147, %v1147
        %s1152 = scalar_lea.vmem %s258, 8 [#allocation10]
        %1153 = vst [vmem:[%s1152] sm:$0xf] %v1148
        %1154 = vst [vmem:[%s1152 + $0x4] sm:$0xf] %v1149
        %s1155 = sand.u32 %s120, 1
        %s1156 = scalar_lea.sflag [#allocation4], %s1155
        %s1157 = sand.u32 %s120, 1
        %s1158 = smul.addr %s1157, 16
        %s1159 = scalar_lea.vmem [#allocation10], %s1158
        // Predicated region
        $region53: #{tpu_custom_call.1} parent=35 // pred_check
          %p1160 = pneg %p130
        $region54: #{tpu_custom_call.1} parent=35 // pred_check_branch
          %1162 = sbr.rel (%p1160) target = $region56
        $region55: #{tpu_custom_call.1} parent=35 // pred_region
          %s1164 = ssub.s32 256, 256
          %1165 = vsyncadd %s1156, %s1164
          %s1166 = smul.addr %s23, 64
          %s1167 = scalar_lea.hbm %s4, %s1166
          %s1168 = sshll.u32 %s1159, 4
          %s1169 = int_to_ptr.vmem [resolvable:$true] %s1168
          %1174 = dma.vmem_to_hbm [thread:$0]  %s1169, 256, %s1167, %s1156, 64, 128, 4
        $region56: #{tpu_custom_call.1} parent=35 // pred_fallthru
          _
      $region36: #{tpu_custom_call.1} parent=5 // pred_fallthru
        _
      %p1175 = scmp.le.s32.totalorder 2, %s18
      // Predicated region
      $region57: #{tpu_custom_call.1} parent=5 // pred_check
        %p1176 = pneg %p1175
      $region58: #{tpu_custom_call.1} parent=5 // pred_check_branch
        %1178 = sbr.rel (%p1176) target = $region60
      $region59: #{tpu_custom_call.1} parent=5 // pred_region
        %s1179 = ssub.s32 %s18, 2
        // Predicated region
        $region61: #{tpu_custom_call.1} parent=59 // pred_check
          %p1180 = pneg %p136
        $region62: #{tpu_custom_call.1} parent=59 // pred_check_branch
          %1182 = sbr.rel (%p1180) target = $region64
        $region63: #{tpu_custom_call.1} parent=59 // pred_region
          %s1183 = sand.u32 %s121, 1
          %s1184 = scalar_lea.sflag [#allocation4], %s1183
          %s1185 = sand.u32 %s121, 1
          %s1186 = smul.addr %s1185, 16
          %s1187 = scalar_lea.vmem [#allocation10], %s1186
          %1188 = dma.done %s1184, 256
        $region64: #{tpu_custom_call.1} parent=59 // pred_fallthru
          _
      $region60: #{tpu_custom_call.1} parent=5 // pred_fallthru
        _
    $region6: #{tpu_custom_call.1} parent=1 // loop_footer
      %s22 = sadd.s32 1, %s18
    $region7: #{tpu_custom_call.1} parent=1 // loop_footer_branch
      %17 = sbr.rel target = $region3
    $region8: #{tpu_custom_call.1} parent=1 // loop_exit
      _
    %1189 = vsyncpa [#allocation3], 1
    %s1190 = scalar_lea.sflag [#allocation3], 1
    %1191 = vsyncpa %s1190, 1
    %1192 = vsyncpa [#allocation6], 1
    %1193 = vsyncpa [#allocation9], 1
    %1194 = vsyncpa [#allocation4], 1
    %s1195 = scalar_lea.sflag [#allocation4], 1
    %1196 = vsyncpa %s1195, 1

</llo_original>
